<compile_context>
chip_gen: v6e
topology: v6e:2x2x1
jax: 0.10.0
libtpu: 0.0.40
codegen_flags: <defaults>
</compile_context>

<pallas_src>
import jax
import jax.numpy as jnp
from jax.experimental import pallas as pl
from jax.experimental.pallas import tpu as pltpu

_LANES = 128                                        # vreg lane width
_SUB = 8                                            # vreg sublanes (f32)
_NEG_BIG = float(jnp.finfo(jnp.float32).min)        # finite "-inf" for running max


def _make_mixed_block_kernel(n: int, block_rows: int, steps_per_core: int):
    """Online softmax-dot over (block_rows, 128) tiles with per-lane accumulators."""
    groups = block_rows // _SUB

    def kernel(mix_ref, hw_ref, m_out, num_out, den_out, m_vec, num_vec, den_vec):
        c = pl.program_id(0)          # TensorCore split ("parallel")
        i = pl.program_id(1)          # row-block step ("arbitrary")

        @pl.when(i == 0)
        def _():
            m_vec[...] = jnp.full_like(m_vec, _NEG_BIG)
            num_vec[...] = jnp.zeros_like(num_vec)
            den_vec[...] = jnp.zeros_like(den_vec)

        # Mask the ragged tail / fully out-of-range duplicate blocks against the
        # true (static) length n.  OOB DMA reads are unspecified -> mask first.
        row0 = (c * steps_per_core + i) * block_rows
        r = jax.lax.broadcasted_iota(jnp.int32, (block_rows, _LANES), 0)
        l = jax.lax.broadcasted_iota(jnp.int32, (block_rows, _LANES), 1)
        valid = (row0 + r) * _LANES + l < n

        # bf16 transport allowed at the boundary; softmax math stays f32.
        x = jnp.where(valid, mix_ref[...].astype(jnp.float32), -jnp.inf)   # exp -> 0
        h = jnp.where(valid, hw_ref[...].astype(jnp.float32), 0.0)

        # (block_rows,128) -> (groups,8,128): sublane-tile-preserving (free).
        # Axis-0 reductions are elementwise across vregs (VPU), no XLU per step.
        x3 = x.reshape(groups, _SUB, _LANES)
        h3 = h.reshape(groups, _SUB, _LANES)

        m_prev = m_vec[...]                               # (8,128)
        m_new = jnp.maximum(m_prev, jnp.max(x3, axis=0))  # (8,128), VPU only
        alpha = jnp.exp(m_prev - m_new)                   # (8,128), EUP
        e3 = jnp.exp(x3 - m_new[None])                    # masked lanes -> exactly 0
        num_vec[...] = alpha * num_vec[...] + jnp.sum(e3 * h3, axis=0)
        den_vec[...] = alpha * den_vec[...] + jnp.sum(e3, axis=0)
        m_vec[...] = m_new

        @pl.when(i == pl.num_programs(1) - 1)
        def _():
            # Per-core per-lane partials; the single cross-lane reduce + divide
            # happens once in the (tiny) wrapper epilogue.
            m_out[...] = m_vec[...][None]
            num_out[...] = num_vec[...][None]
            den_out[...] = den_vec[...][None]

    return kernel


def mixed_block_forward(mix: jax.Array, hardware: jax.Array, *,
                        block_rows: int = 2048, use_pallas=None) -> jax.Array:
    """softmax(mix) . hardware -> scalar f32 (matches MixedBlock.forward)."""
    assert mix.ndim == 1 and mix.shape == hardware.shape
    n = int(mix.shape[0])
    assert n > 0

    if use_pallas is None:
        use_pallas = n >= 4096          # small N: plain XLA beats kernel launch cost
    if not use_pallas:
        p = jax.nn.softmax(mix.astype(jnp.float32), axis=-1)
        return jnp.dot(p, hardware.astype(jnp.float32))

    # Lane/sublane-dense (rows, 128) view.  Zero-copy when n is already a
    # multiple of 128 (and >= 1024); otherwise pad only to the next tile edge.
    rows = max(pl.cdiv(n, _LANES), _SUB)
    n_align = rows * _LANES
    if n_align != n:
        # TODO(synk): keep n a multiple of 128 upstream for a fully zero-copy path.
        mix = jnp.pad(mix, (0, n_align - n))
        hardware = jnp.pad(hardware, (0, n_align - n))
    mix2 = mix.reshape(rows, _LANES)
    hw2 = hardware.reshape(rows, _LANES)

    # Block sizing: multiple of 8 rows and <= rows, so the only ragged reads are
    # the canonical "last block extends past the end" case (masked in-kernel).
    br = max(_SUB, (min(block_rows, rows) // _SUB) * _SUB)
    total_blocks = pl.cdiv(rows, br)

    # Leading "parallel" axis of size 2 -> both v7x TensorCores; serial (and
    # essentially free) on v5e/v6e.
    n_split = 2
    steps = pl.cdiv(total_blocks, n_split)

    kernel = _make_mixed_block_kernel(n, br, steps)

    def in_map(c, i):
        # Clamp fully out-of-range blocks (odd block counts) onto the last real
        # block; their contribution is masked to zero inside the kernel.
        return (jnp.minimum(c * steps + i, total_blocks - 1), 0)

    out_map = lambda c, i: (c, 0, 0)
    part = jax.ShapeDtypeStruct((n_split, _SUB, _LANES), jnp.float32)

    m_p, num_p, den_p = pl.pallas_call(
        kernel,
        out_shape=(part, part, part),
        grid_spec=pltpu.PrefetchScalarGridSpec(
            num_scalar_prefetch=0,
            grid=(n_split, steps),
            in_specs=[
                pl.BlockSpec((br, _LANES), in_map),
                pl.BlockSpec((br, _LANES), in_map),
            ],
            out_specs=[
                pl.BlockSpec((1, _SUB, _LANES), out_map),
                pl.BlockSpec((1, _SUB, _LANES), out_map),
                pl.BlockSpec((1, _SUB, _LANES), out_map),
            ],
            scratch_shapes=[
                pltpu.VMEM((_SUB, _LANES), jnp.float32),   # running per-lane max
                pltpu.VMEM((_SUB, _LANES), jnp.float32),   # running per-lane sum(e*hw)
                pltpu.VMEM((_SUB, _LANES), jnp.float32),   # running per-lane sum(e)
            ],
        ),
        compiler_params=pltpu.CompilerParams(
            dimension_semantics=("parallel", "arbitrary"),
        ),
    )(mix2, hw2)

    # Epilogue: merge the two per-core per-lane partials with one online-softmax
    # combine (~6K elements of fused XLA) and do the single exact divide.
    gm = jnp.max(m_p)
    w = jnp.exp(m_p - gm)
    num = jnp.sum(num_p * w)
    den = jnp.sum(den_p * w)
    return num / den


if __name__ == "__main__":
    key = jax.random.PRNGKey(0)

    # MixedBlock(hardware): latency vector of length N; mix = ones(N) (param init).
    N = 8
    hardware = jax.random.uniform(key, (N,), dtype=jnp.float32, minval=0.5, maxval=2.0)
    mix = jnp.ones((N,), dtype=jnp.float32)

    out = jax.block_until_ready(mixed_block_forward(mix, hardware, use_pallas=True))
    ref = jnp.dot(jax.nn.softmax(mix, axis=-1), hardware)
    assert jnp.allclose(out, ref, rtol=1e-5, atol=1e-6), (out, ref)

    # Default small-N fast path (plain XLA) should also agree.
    out_fast = jax.block_until_ready(mixed_block_forward(mix, hardware))
    assert jnp.allclose(out_fast, ref, rtol=1e-5, atol=1e-6), (out_fast, ref)

    # Multi-step online softmax + ragged-tail masking + dual split (grid (2, 2)).
    k1, k2 = jax.random.split(key)
    N2 = 4000  # not a multiple of 128
    mix_big = jax.random.normal(k1, (N2,), dtype=jnp.float32)
    hw_big = jax.random.uniform(k2, (N2,), dtype=jnp.float32, minval=0.5, maxval=2.0)
    out_big = jax.block_until_ready(
        mixed_block_forward(mix_big, hw_big, block_rows=8, use_pallas=True))
    ref_big = jnp.dot(jax.nn.softmax(mix_big, axis=-1), hw_big)
    assert jnp.allclose(out_big, ref_big, rtol=1e-5, atol=1e-6), (out_big, ref_big)

    # 128-aligned (zero-copy reshape) path with the default large block.
    k3, k4 = jax.random.split(k1)
    N3 = 2048
    mix3 = jax.random.normal(k3, (N3,), dtype=jnp.float32)
    hw3 = jax.random.uniform(k4, (N3,), dtype=jnp.float32, minval=0.5, maxval=2.0)
    out3 = jax.block_until_ready(mixed_block_forward(mix3, hw3, use_pallas=True))
    ref3 = jnp.dot(jax.nn.softmax(mix3, axis=-1), hw3)
    assert jnp.allclose(out3, ref3, rtol=1e-5, atol=1e-6), (out3, ref3)

    print("KERNEL_OK")
</pallas_src>

<mosaic_0001>
module attributes {stable_mosaic.version = 11 : i64} {
  func.func @kernel(%arg0: i32, %arg1: i32, %arg2: memref<8x128xf32, #tpu.memory_space<vmem>>, %arg3: memref<8x128xf32, #tpu.memory_space<vmem>>, %arg4: memref<1x8x128xf32, #tpu.memory_space<vmem>>, %arg5: memref<1x8x128xf32, #tpu.memory_space<vmem>>, %arg6: memref<1x8x128xf32, #tpu.memory_space<vmem>>, %arg7: memref<8x128xf32, #tpu.memory_space<vmem>>, %arg8: memref<8x128xf32, #tpu.memory_space<vmem>>, %arg9: memref<8x128xf32, #tpu.memory_space<vmem>>) attributes {dimension_semantics = [#tpu.dimension_semantics<parallel>, #tpu.dimension_semantics<arbitrary>], iteration_bounds = array<i64: 2, 1>, scalar_prefetch = 0 : i64, scratch_operands = 3 : i64, tpu.core_type = #tpu.core_type<tc>, window_params = [{transform_indices = @transform_0, window_bounds = array<i64: 8, 128>}, {transform_indices = @transform_1, window_bounds = array<i64: 8, 128>}, {transform_indices = @transform_2, window_bounds = array<i64: 1, 8, 128>}, {transform_indices = @transform_3, window_bounds = array<i64: 1, 8, 128>}, {transform_indices = @transform_4, window_bounds = array<i64: 1, 8, 128>}]} {
    %c0_i32 = arith.constant 0 : i32
    %0 = arith.cmpi eq, %arg1, %c0_i32 : i32
    %1 = arith.extui %0 : i1 to i32
    %c0_i32_0 = arith.constant 0 : i32
    %2 = arith.cmpi ne, %1, %c0_i32_0 : i32
    scf.if %2 {
      %cst_23 = arith.constant -3.40282347E+38 : f32
      %46 = vector.broadcast %cst_23 : f32 to vector<8x128xf32>
      %c0_24 = arith.constant 0 : index
      %c0_25 = arith.constant 0 : index
      %47 = vector.load %arg7[%c0_24, %c0_25] : memref<8x128xf32, #tpu.memory_space<vmem>>, vector<8x128xf32>
      tpu.vector_store %arg7[%c0_24, %c0_25], %46 {strides = array<i32>} : memref<8x128xf32, #tpu.memory_space<vmem>>, vector<8x128xf32>,
      %cst_26 = arith.constant 0.000000e+00 : f32
      %48 = vector.broadcast %cst_26 : f32 to vector<8x128xf32>
      %c0_27 = arith.constant 0 : index
      %c0_28 = arith.constant 0 : index
      %49 = vector.load %arg8[%c0_27, %c0_28] : memref<8x128xf32, #tpu.memory_space<vmem>>, vector<8x128xf32>
      tpu.vector_store %arg8[%c0_27, %c0_28], %48 {strides = array<i32>} : memref<8x128xf32, #tpu.memory_space<vmem>>, vector<8x128xf32>,
      %cst_29 = arith.constant 0.000000e+00 : f32
      %50 = vector.broadcast %cst_29 : f32 to vector<8x128xf32>
      %c0_30 = arith.constant 0 : index
      %c0_31 = arith.constant 0 : index
      %51 = vector.load %arg9[%c0_30, %c0_31] : memref<8x128xf32, #tpu.memory_space<vmem>>, vector<8x128xf32>
      tpu.vector_store %arg9[%c0_30, %c0_31], %50 {strides = array<i32>} : memref<8x128xf32, #tpu.memory_space<vmem>>, vector<8x128xf32>,
    } else {
    }
    %c1_i32 = arith.constant 1 : i32
    %3 = arith.muli %arg0, %c1_i32 : i32
    %4 = arith.addi %3, %arg1 : i32
    %c8_i32 = arith.constant 8 : i32
    %5 = arith.muli %4, %c8_i32 : i32
    %6 = tpu.iota {dimensions = array<i32: 0>} : vector<8x128xi32>
    %7 = tpu.iota {dimensions = array<i32: 1>} : vector<8x128xi32>
    %8 = vector.broadcast %5 : i32 to vector<8x128xi32>
    %9 = arith.addi %8, %6 : vector<8x128xi32>
    %c128_i32 = arith.constant 128 : i32
    %10 = vector.broadcast %c128_i32 : i32 to vector<8x128xi32>
    %11 = arith.muli %9, %10 : vector<8x128xi32>
    %12 = arith.addi %11, %7 : vector<8x128xi32>
    %c8_i32_1 = arith.constant 8 : i32
    %13 = vector.broadcast %c8_i32_1 : i32 to vector<8x128xi32>
    %14 = arith.cmpi slt, %12, %13 : vector<8x128xi32>
    %c0 = arith.constant 0 : index
    %c0_2 = arith.constant 0 : index
    %15 = vector.load %arg2[%c0, %c0_2] : memref<8x128xf32, #tpu.memory_space<vmem>>, vector<8x128xf32>
    %cst = arith.constant 0xFF800000 : f32
    %16 = vector.broadcast %cst : f32 to vector<8x128xf32>
    %17 = arith.select %14, %15, %16 : vector<8x128xi1>, vector<8x128xf32>
    %c0_3 = arith.constant 0 : index
    %c0_4 = arith.constant 0 : index
    %18 = vector.load %arg3[%c0_3, %c0_4] : memref<8x128xf32, #tpu.memory_space<vmem>>, vector<8x128xf32>
    %cst_5 = arith.constant 0.000000e+00 : f32
    %19 = vector.broadcast %cst_5 : f32 to vector<8x128xf32>
    %20 = arith.select %14, %18, %19 : vector<8x128xi1>, vector<8x128xf32>
    %21 = vector.shape_cast %17 : vector<8x128xf32> to vector<1x8x128xf32>
    %22 = vector.shape_cast %20 : vector<8x128xf32> to vector<1x8x128xf32>
    %c0_6 = arith.constant 0 : index
    %c0_7 = arith.constant 0 : index
    %23 = vector.load %arg7[%c0_6, %c0_7] : memref<8x128xf32, #tpu.memory_space<vmem>>, vector<8x128xf32>
    %cst_8 = arith.constant dense<0xFF800000> : vector<8x128xf32>
    %24 = vector.multi_reduction <maximumf>, %21, %cst_8 [0] : vector<1x8x128xf32> to vector<8x128xf32>
    %25 = arith.maximumf %23, %24 : vector<8x128xf32>
    %26 = arith.subf %23, %25 : vector<8x128xf32>
    %27 = math.exp %26 : vector<8x128xf32>
    %28 = vector.shape_cast %25 : vector<8x128xf32> to vector<1x8x128xf32>
    %29 = arith.subf %21, %28 : vector<1x8x128xf32>
    %30 = math.exp %29 : vector<1x8x128xf32>
    %c0_9 = arith.constant 0 : index
    %c0_10 = arith.constant 0 : index
    %31 = vector.load %arg8[%c0_9, %c0_10] : memref<8x128xf32, #tpu.memory_space<vmem>>, vector<8x128xf32>
    %32 = arith.mulf %27, %31 : vector<8x128xf32>
    %33 = arith.mulf %30, %22 : vector<1x8x128xf32>
    %cst_11 = arith.constant dense<0.000000e+00> : vector<8x128xf32>
    %34 = vector.multi_reduction <add>, %33, %cst_11 [0] : vector<1x8x128xf32> to vector<8x128xf32>
    %35 = arith.addf %32, %34 : vector<8x128xf32>
    %c0_12 = arith.constant 0 : index
    %c0_13 = arith.constant 0 : index
    %36 = vector.load %arg8[%c0_12, %c0_13] : memref<8x128xf32, #tpu.memory_space<vmem>>, vector<8x128xf32>
    tpu.vector_store %arg8[%c0_12, %c0_13], %35 {strides = array<i32>} : memref<8x128xf32, #tpu.memory_space<vmem>>, vector<8x128xf32>,
    %c0_14 = arith.constant 0 : index
    %c0_15 = arith.constant 0 : index
    %37 = vector.load %arg9[%c0_14, %c0_15] : memref<8x128xf32, #tpu.memory_space<vmem>>, vector<8x128xf32>
    %38 = arith.mulf %27, %37 : vector<8x128xf32>
    %cst_16 = arith.constant dense<0.000000e+00> : vector<8x128xf32>
    %39 = vector.multi_reduction <add>, %30, %cst_16 [0] : vector<1x8x128xf32> to vector<8x128xf32>
    %40 = arith.addf %38, %39 : vector<8x128xf32>
    %c0_17 = arith.constant 0 : index
    %c0_18 = arith.constant 0 : index
    %41 = vector.load %arg9[%c0_17, %c0_18] : memref<8x128xf32, #tpu.memory_space<vmem>>, vector<8x128xf32>
    tpu.vector_store %arg9[%c0_17, %c0_18], %40 {strides = array<i32>} : memref<8x128xf32, #tpu.memory_space<vmem>>, vector<8x128xf32>,
    %c0_19 = arith.constant 0 : index
    %c0_20 = arith.constant 0 : index
    %42 = vector.load %arg7[%c0_19, %c0_20] : memref<8x128xf32, #tpu.memory_space<vmem>>, vector<8x128xf32>
    tpu.vector_store %arg7[%c0_19, %c0_20], %25 {strides = array<i32>} : memref<8x128xf32, #tpu.memory_space<vmem>>, vector<8x128xf32>,
    %c0_i32_21 = arith.constant 0 : i32
    %43 = arith.cmpi eq, %arg1, %c0_i32_21 : i32
    %44 = arith.extui %43 : i1 to i32
    %c0_i32_22 = arith.constant 0 : i32
    %45 = arith.cmpi ne, %44, %c0_i32_22 : i32
    scf.if %45 {
      %c0_23 = arith.constant 0 : index
      %c0_24 = arith.constant 0 : index
      %46 = vector.load %arg7[%c0_23, %c0_24] : memref<8x128xf32, #tpu.memory_space<vmem>>, vector<8x128xf32>
      %47 = vector.shape_cast %46 : vector<8x128xf32> to vector<1x8x128xf32>
      %c0_25 = arith.constant 0 : index
      %c0_26 = arith.constant 0 : index
      %c0_27 = arith.constant 0 : index
      %48 = vector.load %arg4[%c0_25, %c0_26, %c0_27] : memref<1x8x128xf32, #tpu.memory_space<vmem>>, vector<1x8x128xf32>
      tpu.vector_store %arg4[%c0_25, %c0_26, %c0_27], %47 {strides = array<i32>} : memref<1x8x128xf32, #tpu.memory_space<vmem>>, vector<1x8x128xf32>,
      %c0_28 = arith.constant 0 : index
      %c0_29 = arith.constant 0 : index
      %49 = vector.load %arg8[%c0_28, %c0_29] : memref<8x128xf32, #tpu.memory_space<vmem>>, vector<8x128xf32>
      %50 = vector.shape_cast %49 : vector<8x128xf32> to vector<1x8x128xf32>
      %c0_30 = arith.constant 0 : index
      %c0_31 = arith.constant 0 : index
      %c0_32 = arith.constant 0 : index
      %51 = vector.load %arg5[%c0_30, %c0_31, %c0_32] : memref<1x8x128xf32, #tpu.memory_space<vmem>>, vector<1x8x128xf32>
      tpu.vector_store %arg5[%c0_30, %c0_31, %c0_32], %50 {strides = array<i32>} : memref<1x8x128xf32, #tpu.memory_space<vmem>>, vector<1x8x128xf32>,
      %c0_33 = arith.constant 0 : index
      %c0_34 = arith.constant 0 : index
      %52 = vector.load %arg9[%c0_33, %c0_34] : memref<8x128xf32, #tpu.memory_space<vmem>>, vector<8x128xf32>
      %53 = vector.shape_cast %52 : vector<8x128xf32> to vector<1x8x128xf32>
      %c0_35 = arith.constant 0 : index
      %c0_36 = arith.constant 0 : index
      %c0_37 = arith.constant 0 : index
      %54 = vector.load %arg6[%c0_35, %c0_36, %c0_37] : memref<1x8x128xf32, #tpu.memory_space<vmem>>, vector<1x8x128xf32>
      tpu.vector_store %arg6[%c0_35, %c0_36, %c0_37], %53 {strides = array<i32>} : memref<1x8x128xf32, #tpu.memory_space<vmem>>, vector<1x8x128xf32>,
    } else {
    }
    return
  }
  func.func @transform_0(%arg0: i32, %arg1: i32) -> (i32, i32) {
    %c1_i32 = arith.constant 1 : i32
    %0 = arith.muli %arg0, %c1_i32 : i32
    %1 = arith.addi %0, %arg1 : i32
    %c0_i32 = arith.constant 0 : i32
    %2 = arith.minsi %1, %c0_i32 : i32
    %c0_i32_0 = arith.constant 0 : i32
    %c0_i32_1 = arith.constant 0 : i32
    return %2, %c0_i32_0 : i32, i32
  }
  func.func @transform_1(%arg0: i32, %arg1: i32) -> (i32, i32) {
    %c1_i32 = arith.constant 1 : i32
    %0 = arith.muli %arg0, %c1_i32 : i32
    %1 = arith.addi %0, %arg1 : i32
    %c0_i32 = arith.constant 0 : i32
    %2 = arith.minsi %1, %c0_i32 : i32
    %c0_i32_0 = arith.constant 0 : i32
    %c0_i32_1 = arith.constant 0 : i32
    return %2, %c0_i32_0 : i32, i32
  }
  func.func @transform_2(%arg0: i32, %arg1: i32) -> (i32, i32, i32) {
    %c0_i32 = arith.constant 0 : i32
    %c0_i32_0 = arith.constant 0 : i32
    %c0_i32_1 = arith.constant 0 : i32
    return %arg0, %c0_i32, %c0_i32_0 : i32, i32, i32
  }
  func.func @transform_3(%arg0: i32, %arg1: i32) -> (i32, i32, i32) {
    %c0_i32 = arith.constant 0 : i32
    %c0_i32_0 = arith.constant 0 : i32
    %c0_i32_1 = arith.constant 0 : i32
    return %arg0, %c0_i32, %c0_i32_0 : i32, i32, i32
  }
  func.func @transform_4(%arg0: i32, %arg1: i32) -> (i32, i32, i32) {
    %c0_i32 = arith.constant 0 : i32
    %c0_i32_0 = arith.constant 0 : i32
    %c0_i32_1 = arith.constant 0 : i32
    return %arg0, %c0_i32, %c0_i32_0 : i32, i32, i32
  }
}

</mosaic_0001>

<llo_original>
// kernel: tpu_custom_call.1
$region0: #{tpu_custom_call.1}
  #allocation0 [shape = 'u32[]', space=smem, size = 0x4, offset = 0x4, fixed_abs, tag = 'smem constant byte address 0x4 - core index']
  #allocation1 [shape = 'u32[144,128]{1,0:T(1,128)}', space=vmem, size = 0x12000, scoped, tag = 'internal scratch']
  #allocation2 [shape = 'f32[8,128]{1,0:T(8,128)}', space=vmem, size = 0x1000, scoped, tag = 'scratch operand']
  #allocation3 [shape = 'f32[8,128]{1,0:T(8,128)}', space=vmem, size = 0x1000, scoped, tag = 'scratch operand']
  #allocation4 [shape = 'f32[8,128]{1,0:T(8,128)}', space=vmem, size = 0x1000, scoped, tag = 'scratch operand']
  %s0 = inlined_call_operand.hbm [shape: f32[8,128], index: 0, kind: input, shape index: {}]
  %s1 = inlined_call_operand.hbm [shape: f32[8,128], index: 1, kind: input, shape index: {}]
  %s2 = inlined_call_operand.hbm [shape: f32[2,8,128], index: 2, kind: output, shape index: {0}]
  %s3 = inlined_call_operand.hbm [shape: f32[2,8,128], index: 3, kind: output, shape index: {1}]
  %s4 = inlined_call_operand.hbm [shape: f32[2,8,128], index: 4, kind: output, shape index: {2}]
  %5 = xla_tuple %s2, %s3, %s4
  %s6 = sld [smem:[#allocation0]]
  $region73: #{tpu_custom_call.1} parent=0
    _
  %s8 = ssub.s32 1, %s6
  %s9 = scalar_select 0, %s8, %s6
  $region1: #{tpu_custom_call.1} parent=0
    #allocation5 [shape = 'u8[8192]{0}', space=vmem, size = 0x2000, scoped, tag = 'input window, operand 0']
    #allocation6 [shape = 's32[2]{0}', space=sflag, size = 0x8, scoped, tag = 'scoped memory for tpu_custom_call.1']
    #allocation7 [shape = 's32[2]{0}', space=sflag, size = 0x8, scoped, tag = 'scoped memory for tpu_custom_call.1']
    #allocation8 [shape = 'u8[8192]{0}', space=vmem, size = 0x2000, scoped, tag = 'input window, operand 1']
    #allocation9 [shape = 's32[2]{0}', space=sflag, size = 0x8, scoped, tag = 'scoped memory for tpu_custom_call.1']
    #allocation10 [shape = 'u8[8192]{0}', space=vmem, size = 0x2000, scoped, tag = 'output window, operand 0']
    #allocation11 [shape = 'u8[8192]{0}', space=vmem, size = 0x2000, scoped, tag = 'output window, operand 1']
    #allocation12 [shape = 's32[2]{0}', space=sflag, size = 0x8, scoped, tag = 'scoped memory for tpu_custom_call.1']
    #allocation13 [shape = 'u8[8192]{0}', space=vmem, size = 0x2000, scoped, tag = 'output window, operand 2']
    %10 = vsyncpa [#allocation6], 0
    %s11 = scalar_lea.sflag [#allocation6], 1
    %12 = vsyncpa %s11, 0
    %13 = vsyncpa [#allocation9], 0
    %s14 = scalar_lea.sflag [#allocation9], 1
    %15 = vsyncpa %s14, 0
    %16 = vsyncpa [#allocation7], 0
    %s17 = scalar_lea.sflag [#allocation7], 1
    %18 = vsyncpa %s17, 0
    %19 = vsyncpa [#allocation12], 0
    %s20 = scalar_lea.sflag [#allocation12], 1
    %21 = vsyncpa %s20, 0
    loop: start=0, step=1, limit=4
    $region2: #{tpu_custom_call.1} parent=1 // loop_pre_header
      _
    $region3: #{tpu_custom_call.1} parent=1 // loop_header
      %s23 = sphi 0, %s27
      %p24 = scmp.ge.s32.totalorder %s23, 4
      %s30 = sphi 0, %s42
      %s31 = sphi 0, %s38
      %s32 = sphi 0, %s30
      %s33 = sphi 0, %s31
      %s34 = sphi 0, %s32
      %s35 = sphi 0, %s33
      %s51 = sphi 0, %s53
      %s54 = sphi 0, %s51
      %s55 = sphi 0, %s54
      %s71 = sphi 0, %s55
      %s83 = sphi 0, %s85
      %s86 = sphi 0, %s83
      %s87 = sphi 0, %s86
      %s103 = sphi 0, %s87
      %s109 = sphi 0, %s111
      %s112 = sphi 0, %s109
      %s113 = sphi 0, %s112
      %s129 = sphi 0, %s113
      %s135 = sphi 0, %s137
      %s138 = sphi 0, %s135
      %s139 = sphi 0, %s138
      %s155 = sphi 0, %s139
      %s161 = sphi 0, %s163
      %s164 = sphi 0, %s161
      %s165 = sphi 0, %s164
      %s181 = sphi 0, %s165
    $region4: #{tpu_custom_call.1} parent=1 // loop_header_branch
      %26 = sbr.rel (%p24) target = $region8
    $region5: #{tpu_custom_call.1} parent=1 // loop_body
      %s28 = ssub.s32 %s23, 1
      %s29 = ssub.s32 %s23, 2
      %s36 = sadd.s32 1, %s31
      %p37 = scmp.ge.s32.totalorder %s36, 1
      %s38 = scalar_select %p37, 0, %s36
      %s39 = sadd.s32 1, %s30
      %s40 = scalar_select %p37, %s39, %s30
      %p41 = scmp.ge.s32.totalorder %s40, 2
      %s42 = scalar_select %p41, 0, %s40
      %s43 = sadd.s32 %s30, %s31
      %p44 = scmp.lt.s32.totalorder %s43, 0
      %s45 = scalar_select %p44, %s43, 0
      %s46 = sadd.s32 %s42, %s38
      %p47 = scmp.lt.s32.totalorder %s46, 0
      %s48 = scalar_select %p47, %s46, 0
      %s49 = ssub.s32 %s45, %s48
      %p50 = scmp.eq.s32.totalorder %s49, 0
      %s52 = sadd.s32 %s51, 1
      %s53 = scalar_select %p50, %s51, %s52
      %p56 = pneg %p50
      %p57 = scmp.eq.s32.totalorder %s23, 1
      %p58 = por %p56, %p57
      %p59 = scmp.ne.s32.totalorder %s51, %s54
      %p60 = scmp.eq.s32.totalorder %s23, 0
      %p61 = por %p59, %p60
      %p62 = scmp.ne.s32.totalorder %s51, %s54
      %p63 = scmp.eq.s32.totalorder %s28, 1
      %p64 = por %p62, %p63
      %p65 = scmp.ne.s32.totalorder %s54, %s55
      %p66 = scmp.eq.s32.totalorder %s28, 0
      %p67 = por %p65, %p66
      %p68 = scmp.ne.s32.totalorder %s54, %s55
      %p69 = scmp.eq.s32.totalorder %s29, 1
      %p70 = por %p68, %p69
      %p72 = scmp.ne.s32.totalorder %s55, %s71
      %p73 = scmp.eq.s32.totalorder %s29, 0
      %p74 = por %p72, %p73
      %s75 = sadd.s32 %s30, %s31
      %p76 = scmp.lt.s32.totalorder %s75, 0
      %s77 = scalar_select %p76, %s75, 0
      %s78 = sadd.s32 %s42, %s38
      %p79 = scmp.lt.s32.totalorder %s78, 0
      %s80 = scalar_select %p79, %s78, 0
      %s81 = ssub.s32 %s77, %s80
      %p82 = scmp.eq.s32.totalorder %s81, 0
      %s84 = sadd.s32 %s83, 1
      %s85 = scalar_select %p82, %s83, %s84
      %p88 = pneg %p82
      %p89 = scmp.eq.s32.totalorder %s23, 1
      %p90 = por %p88, %p89
      %p91 = scmp.ne.s32.totalorder %s83, %s86
      %p92 = scmp.eq.s32.totalorder %s23, 0
      %p93 = por %p91, %p92
      %p94 = scmp.ne.s32.totalorder %s83, %s86
      %p95 = scmp.eq.s32.totalorder %s28, 1
      %p96 = por %p94, %p95
      %p97 = scmp.ne.s32.totalorder %s86, %s87
      %p98 = scmp.eq.s32.totalorder %s28, 0
      %p99 = por %p97, %p98
      %p100 = scmp.ne.s32.totalorder %s86, %s87
      %p101 = scmp.eq.s32.totalorder %s29, 1
      %p102 = por %p100, %p101
      %p104 = scmp.ne.s32.totalorder %s87, %s103
      %p105 = scmp.eq.s32.totalorder %s29, 0
      %p106 = por %p104, %p105
      %s107 = ssub.s32 %s30, %s42
      %p108 = scmp.eq.s32.totalorder %s107, 0
      %s110 = sadd.s32 %s109, 1
      %s111 = scalar_select %p108, %s109, %s110
      %p114 = pneg %p108
      %p115 = scmp.eq.s32.totalorder %s23, 1
      %p116 = por %p114, %p115
      %p117 = scmp.ne.s32.totalorder %s109, %s112
      %p118 = scmp.eq.s32.totalorder %s23, 0
      %p119 = por %p117, %p118
      %p120 = scmp.ne.s32.totalorder %s109, %s112
      %p121 = scmp.eq.s32.totalorder %s28, 1
      %p122 = por %p120, %p121
      %p123 = scmp.ne.s32.totalorder %s112, %s113
      %p124 = scmp.eq.s32.totalorder %s28, 0
      %p125 = por %p123, %p124
      %p126 = scmp.ne.s32.totalorder %s112, %s113
      %p127 = scmp.eq.s32.totalorder %s29, 1
      %p128 = por %p126, %p127
      %p130 = scmp.ne.s32.totalorder %s113, %s129
      %p131 = scmp.eq.s32.totalorder %s29, 0
      %p132 = por %p130, %p131
      %s133 = ssub.s32 %s30, %s42
      %p134 = scmp.eq.s32.totalorder %s133, 0
      %s136 = sadd.s32 %s135, 1
      %s137 = scalar_select %p134, %s135, %s136
      %p140 = pneg %p134
      %p141 = scmp.eq.s32.totalorder %s23, 1
      %p142 = por %p140, %p141
      %p143 = scmp.ne.s32.totalorder %s135, %s138
      %p144 = scmp.eq.s32.totalorder %s23, 0
      %p145 = por %p143, %p144
      %p146 = scmp.ne.s32.totalorder %s135, %s138
      %p147 = scmp.eq.s32.totalorder %s28, 1
      %p148 = por %p146, %p147
      %p149 = scmp.ne.s32.totalorder %s138, %s139
      %p150 = scmp.eq.s32.totalorder %s28, 0
      %p151 = por %p149, %p150
      %p152 = scmp.ne.s32.totalorder %s138, %s139
      %p153 = scmp.eq.s32.totalorder %s29, 1
      %p154 = por %p152, %p153
      %p156 = scmp.ne.s32.totalorder %s139, %s155
      %p157 = scmp.eq.s32.totalorder %s29, 0
      %p158 = por %p156, %p157
      %s159 = ssub.s32 %s30, %s42
      %p160 = scmp.eq.s32.totalorder %s159, 0
      %s162 = sadd.s32 %s161, 1
      %s163 = scalar_select %p160, %s161, %s162
      %p166 = pneg %p160
      %p167 = scmp.eq.s32.totalorder %s23, 1
      %p168 = por %p166, %p167
      %p169 = scmp.ne.s32.totalorder %s161, %s164
      %p170 = scmp.eq.s32.totalorder %s23, 0
      %p171 = por %p169, %p170
      %p172 = scmp.ne.s32.totalorder %s161, %s164
      %p173 = scmp.eq.s32.totalorder %s28, 1
      %p174 = por %p172, %p173
      %p175 = scmp.ne.s32.totalorder %s164, %s165
      %p176 = scmp.eq.s32.totalorder %s28, 0
      %p177 = por %p175, %p176
      %p178 = scmp.ne.s32.totalorder %s164, %s165
      %p179 = scmp.eq.s32.totalorder %s29, 1
      %p180 = por %p178, %p179
      %p182 = scmp.ne.s32.totalorder %s165, %s181
      %p183 = scmp.eq.s32.totalorder %s29, 0
      %p184 = por %p182, %p183
      %p185 = scmp.le.s32.totalorder 1, %s23
      %p186 = scmp.lt.s32.totalorder %s23, 3
      %p187 = pnand %p185, %p186
      %p188 = pneg %p187
      // Predicated region
      $region9: #{tpu_custom_call.1} parent=5 // pred_check
        _
      $region10: #{tpu_custom_call.1} parent=5 // pred_check_branch
        %190 = sbr.rel (%p187) target = $region12
      $region11: #{tpu_custom_call.1} parent=5 // pred_region
        %s191 = ssub.s32 %s23, 1
      $region12: #{tpu_custom_call.1} parent=5 // pred_fallthru
        _
      %p192 = scmp.lt.s32.totalorder %s23, 2
      // Predicated region
      $region13: #{tpu_custom_call.1} parent=5 // pred_check
        %p193 = pneg %p192
      $region14: #{tpu_custom_call.1} parent=5 // pred_check_branch
        %195 = sbr.rel (%p193) target = $region16
      $region15: #{tpu_custom_call.1} parent=5 // pred_region
        // Predicated region
        $region17: #{tpu_custom_call.1} parent=15 // pred_check
          %p196 = pneg %p61
        $region18: #{tpu_custom_call.1} parent=15 // pred_check_branch
          %198 = sbr.rel (%p196) target = $region20
        $region19: #{tpu_custom_call.1} parent=15 // pred_region
          %s199 = sand.u32 %s51, 1
          %s200 = scalar_lea.sflag [#allocation6], %s199
          %s201 = sand.u32 %s51, 1
          %s202 = smul.addr %s201, 8
          %s203 = scalar_lea.vmem [#allocation5], %s202
          %s204 = sadd.s32 %s30, %s31
          %p205 = scmp.lt.s32.totalorder %s204, 0
          %s206 = scalar_select %p205, %s204, 0
          %s208 = ssub.s32 128, 128
          %209 = vsyncadd %s200, %s208
          %s210 = smul.addr %s206, 128
          %s211 = scalar_lea.hbm %s0, %s210
          %s213 = sshll.u32 %s203, 4
          %s214 = int_to_ptr.vmem [resolvable:$true] %s213
          %216 = dma.hbm_to_vmem [thread:$0]  %s211, 128, %s214, %s200
        $region20: #{tpu_custom_call.1} parent=15 // pred_fallthru
          _
        // Predicated region
        $region21: #{tpu_custom_call.1} parent=15 // pred_check
          %p217 = pneg %p93
        $region22: #{tpu_custom_call.1} parent=15 // pred_check_branch
          %219 = sbr.rel (%p217) target = $region24
        $region23: #{tpu_custom_call.1} parent=15 // pred_region
          %s220 = sand.u32 %s83, 1
          %s221 = scalar_lea.sflag [#allocation9], %s220
          %s222 = sand.u32 %s83, 1
          %s223 = smul.addr %s222, 8
          %s224 = scalar_lea.vmem [#allocation8], %s223
          %s225 = sadd.s32 %s30, %s31
          %p226 = scmp.lt.s32.totalorder %s225, 0
          %s227 = scalar_select %p226, %s225, 0
          %s229 = ssub.s32 128, 128
          %230 = vsyncadd %s221, %s229
          %s231 = smul.addr %s227, 128
          %s232 = scalar_lea.hbm %s1, %s231
          %s234 = sshll.u32 %s224, 4
          %s235 = int_to_ptr.vmem [resolvable:$true] %s234
          %237 = dma.hbm_to_vmem [thread:$0]  %s232, 128, %s235, %s221
        $region24: #{tpu_custom_call.1} parent=15 // pred_fallthru
          _
      $region16: #{tpu_custom_call.1} parent=5 // pred_fallthru
        _
      %p238 = scmp.le.s32.totalorder 1, %s23
      %p239 = scmp.lt.s32.totalorder %s23, 3
      %p240 = pnand %p238, %p239
      %p241 = pneg %p240
      // Predicated region
      $region25: #{tpu_custom_call.1} parent=5 // pred_check
        _
      $region26: #{tpu_custom_call.1} parent=5 // pred_check_branch
        %243 = sbr.rel (%p240) target = $region28
      $region27: #{tpu_custom_call.1} parent=5 // pred_region
        %s244 = ssub.s32 %s23, 1
        %s245 = sand.u32 %s54, 1
        %s246 = scalar_lea.sflag [#allocation6], %s245
        %s247 = sand.u32 %s54, 1
        %s248 = smul.addr %s247, 8
        %s249 = scalar_lea.vmem [#allocation5], %s248
        // Predicated region
        $region29: #{tpu_custom_call.1} parent=27 // pred_check
          %p250 = pneg %p67
        $region30: #{tpu_custom_call.1} parent=27 // pred_check_branch
          %252 = sbr.rel (%p250) target = $region32
        $region31: #{tpu_custom_call.1} parent=27 // pred_region
          %253 = dma.done %s246, 128
        $region32: #{tpu_custom_call.1} parent=27 // pred_fallthru
          _
        %s254 = sand.u32 %s86, 1
        %s255 = scalar_lea.sflag [#allocation9], %s254
        %s256 = sand.u32 %s86, 1
        %s257 = smul.addr %s256, 8
        %s258 = scalar_lea.vmem [#allocation8], %s257
        // Predicated region
        $region33: #{tpu_custom_call.1} parent=27 // pred_check
          %p259 = pneg %p99
        $region34: #{tpu_custom_call.1} parent=27 // pred_check_branch
          %261 = sbr.rel (%p259) target = $region36
        $region35: #{tpu_custom_call.1} parent=27 // pred_region
          %262 = dma.done %s255, 128
        $region36: #{tpu_custom_call.1} parent=27 // pred_fallthru
          _
        %s263 = sand.u32 %s54, 1
        %s264 = scalar_lea.sflag [#allocation6], %s263
        %s265 = sand.u32 %s54, 1
        %s266 = smul.addr %s265, 8
        %s267 = scalar_lea.vmem [#allocation5], %s266
        %p268 = pneg %p67
        %p269 = pneg %p64
        %s270 = sand.u32 %s86, 1
        %s271 = scalar_lea.sflag [#allocation9], %s270
        %s272 = sand.u32 %s86, 1
        %s273 = smul.addr %s272, 8
        %s274 = scalar_lea.vmem [#allocation8], %s273
        %p275 = pneg %p99
        %p276 = pneg %p96
        %p277 = pneg %p125
        %p278 = pneg %p122
        %s279 = sand.u32 %s112, 1
        %s280 = scalar_lea.sflag [#allocation7], %s279
        %s281 = sand.u32 %s112, 1
        %s282 = smul.addr %s281, 8
        %s283 = scalar_lea.vmem [#allocation10], %s282
        %p284 = pneg %p151
        %p285 = pneg %p148
        %s286 = sand.u32 %s28, 1
        %s287 = scalar_lea.sflag [#allocation12], %s286
        %s288 = sand.u32 %s138, 1
        %s289 = smul.addr %s288, 8
        %s290 = scalar_lea.vmem [#allocation11], %s289
        %p291 = pneg %p177
        %p292 = pneg %p174
        %s293 = sand.u32 %s28, 1
        %s294 = scalar_lea.sflag [#allocation12], %s293
        %s295 = sand.u32 %s164, 1
        %s296 = smul.addr %s295, 8
        %s297 = scalar_lea.vmem [#allocation13], %s296
        %s298 = sadd.s32 %s32, %s33
        %p299 = scmp.lt.s32.totalorder %s298, 0
        %s300 = scalar_select %p299, %s298, 0
        %s301 = sadd.s32 %s32, %s33
        %p302 = scmp.lt.s32.totalorder %s301, 0
        %s303 = scalar_select %p302, %s301, 0
        %p304 = scmp.eq.s32.totalorder %s33, 0
        // Predicated region
        $region37: #{tpu_custom_call.1} parent=27 // pred_check
          %p305 = pneg %p304
        $region38: #{tpu_custom_call.1} parent=27 // pred_check_branch
          %307 = sbr.rel (%p305) target = $region40
        $region39: #{tpu_custom_call.1} parent=27 // pred_region
          %308 = vst [vmem:[#allocation2] sm:$0xff] -3.4028235e+38
          %309 = vst [vmem:[#allocation3] sm:$0xff] 0.0
          %310 = vst [vmem:[#allocation4] sm:$0xff] 0.0
        $region40: #{tpu_custom_call.1} parent=27 // pred_fallthru
          _
        %s311 = sadd.s32 %s32, %s33
        %s312 = smul.u32 %s311, 8
        %v313 = vlaneseq
        %v314 = vshrl.u32 %v313, 7
        %v315 = vlaneseq
        %v316 = vand.u32 %v315, 127
        %v317 = vstv %s312
        %v318 = vadd.s32 %v317, %v314
        %v319 = vmul.u32 %v318, 128
        %v320 = vadd.s32 %v319, %v316
        %vm321 = vcmp.lt.s32.totalorder %v320, 8
        %v322 = vld [vmem:[%s249] sm:$0xff]
        %v323 = vsel %vm321, %v322, -inf
        %v324 = vld [vmem:[%s258] sm:$0xff]
        %v325 = vsel %vm321, %v324, 0.0
        %v326 = vld [vmem:[#allocation2] sm:$0xff]
        %v327 = vmax.f32 %v326, %v323
        %v328 = vsub.f32 %v326, %v327
        %v329 = vmul.f32 %v328, 1.442695
        %v330 = vpow.pop %v329
        %v331 = vsub.f32 %v323, %v327
        %v332 = vmul.f32 %v331, 1.442695
        %v333 = vpow.pop %v332
        %v334 = vld [vmem:[#allocation3] sm:$0xff]
        %v335 = vmul.f32 %v330, %v334
        %v336 = vmul.f32 %v333, %v325
        %v337 = vadd.f32 %v336, 0.0
        %v338 = vadd.f32 %v335, %v337
        %339 = vst [vmem:[#allocation3] sm:$0xff] %v338
        %v340 = vld [vmem:[#allocation4] sm:$0xff]
        %v341 = vmul.f32 %v330, %v340
        %v342 = vadd.f32 %v333, 0.0
        %v343 = vadd.f32 %v341, %v342
        %344 = vst [vmem:[#allocation4] sm:$0xff] %v343
        %345 = vst [vmem:[#allocation2] sm:$0xff] %v327
        // Predicated region
        $region41: #{tpu_custom_call.1} parent=27 // pred_check
          %p346 = pneg %p304
        $region42: #{tpu_custom_call.1} parent=27 // pred_check_branch
          %348 = sbr.rel (%p346) target = $region44
        $region43: #{tpu_custom_call.1} parent=27 // pred_region
          %v349 = vld [vmem:[#allocation2] sm:$0xff]
          %350 = vst [vmem:[%s283] sm:$0xff] %v349
          %v351 = vld [vmem:[#allocation3] sm:$0xff]
          %352 = vst [vmem:[%s290] sm:$0xff] %v351
          %v353 = vld [vmem:[#allocation4] sm:$0xff]
          %354 = vst [vmem:[%s297] sm:$0xff] %v353
        $region44: #{tpu_custom_call.1} parent=27 // pred_fallthru
          _
        %s355 = sand.u32 %s112, 1
        %s356 = scalar_lea.sflag [#allocation7], %s355
        %s357 = sand.u32 %s112, 1
        %s358 = smul.addr %s357, 8
        %s359 = scalar_lea.vmem [#allocation10], %s358
        %s360 = sand.u32 %s28, 1
        %s361 = scalar_lea.sflag [#allocation12], %s360
        %s362 = sand.u32 %s138, 1
        %s363 = smul.addr %s362, 8
        %s364 = scalar_lea.vmem [#allocation11], %s363
        %s365 = sand.u32 %s28, 1
        %s366 = scalar_lea.sflag [#allocation12], %s365
        %s367 = sand.u32 %s164, 1
        %s368 = smul.addr %s367, 8
        %s369 = scalar_lea.vmem [#allocation13], %s368
        // Predicated region
        $region45: #{tpu_custom_call.1} parent=27 // pred_check
          %p370 = pneg %p122
        $region46: #{tpu_custom_call.1} parent=27 // pred_check_branch
          %372 = sbr.rel (%p370) target = $region48
        $region47: #{tpu_custom_call.1} parent=27 // pred_region
          %s374 = ssub.s32 128, 128
          %375 = vsyncadd %s356, %s374
          %s376 = smul.addr %s32, 128
          %s377 = scalar_lea.hbm %s2, %s376
          %s379 = sshll.u32 %s359, 4
          %s380 = int_to_ptr.vmem [resolvable:$true] %s379
          %382 = dma.vmem_to_hbm [thread:$0]  %s380, 128, %s377, %s356
        $region48: #{tpu_custom_call.1} parent=27 // pred_fallthru
          _
        // Predicated region
        $region49: #{tpu_custom_call.1} parent=27 // pred_check
          %p383 = pneg %p148
        $region50: #{tpu_custom_call.1} parent=27 // pred_check_branch
          %385 = sbr.rel (%p383) target = $region52
        $region51: #{tpu_custom_call.1} parent=27 // pred_region
          %s387 = ssub.s32 128, 128
          %388 = vsyncadd %s361, %s387
          %s389 = smul.addr %s32, 128
          %s390 = scalar_lea.hbm %s3, %s389
          %s392 = sshll.u32 %s364, 4
          %s393 = int_to_ptr.vmem [resolvable:$true] %s392
          %395 = dma.vmem_to_hbm [thread:$0]  %s393, 128, %s390, %s361
        $region52: #{tpu_custom_call.1} parent=27 // pred_fallthru
          _
        // Predicated region
        $region53: #{tpu_custom_call.1} parent=27 // pred_check
          %p396 = pneg %p174
        $region54: #{tpu_custom_call.1} parent=27 // pred_check_branch
          %398 = sbr.rel (%p396) target = $region56
        $region55: #{tpu_custom_call.1} parent=27 // pred_region
          %s400 = ssub.s32 128, 128
          %401 = vsyncadd %s366, %s400
          %s402 = smul.addr %s32, 128
          %s403 = scalar_lea.hbm %s4, %s402
          %s405 = sshll.u32 %s369, 4
          %s406 = int_to_ptr.vmem [resolvable:$true] %s405
          %408 = dma.vmem_to_hbm [thread:$0]  %s406, 128, %s403, %s366
        $region56: #{tpu_custom_call.1} parent=27 // pred_fallthru
          _
      $region28: #{tpu_custom_call.1} parent=5 // pred_fallthru
        _
      %p409 = scmp.le.s32.totalorder 2, %s23
      // Predicated region
      $region57: #{tpu_custom_call.1} parent=5 // pred_check
        %p410 = pneg %p409
      $region58: #{tpu_custom_call.1} parent=5 // pred_check_branch
        %412 = sbr.rel (%p410) target = $region60
      $region59: #{tpu_custom_call.1} parent=5 // pred_region
        %s413 = ssub.s32 %s23, 2
        // Predicated region
        $region61: #{tpu_custom_call.1} parent=59 // pred_check
          %p414 = pneg %p128
        $region62: #{tpu_custom_call.1} parent=59 // pred_check_branch
          %416 = sbr.rel (%p414) target = $region64
        $region63: #{tpu_custom_call.1} parent=59 // pred_region
          %s417 = sand.u32 %s113, 1
          %s418 = scalar_lea.sflag [#allocation7], %s417
          %s419 = sand.u32 %s113, 1
          %s420 = smul.addr %s419, 8
          %s421 = scalar_lea.vmem [#allocation10], %s420
          %422 = dma.done %s418, 128
        $region64: #{tpu_custom_call.1} parent=59 // pred_fallthru
          _
        // Predicated region
        $region65: #{tpu_custom_call.1} parent=59 // pred_check
          %p423 = pneg %p154
        $region66: #{tpu_custom_call.1} parent=59 // pred_check_branch
          %425 = sbr.rel (%p423) target = $region68
        $region67: #{tpu_custom_call.1} parent=59 // pred_region
          %s426 = sand.u32 %s29, 1
          %s427 = scalar_lea.sflag [#allocation12], %s426
          %s428 = sand.u32 %s139, 1
          %s429 = smul.addr %s428, 8
          %s430 = scalar_lea.vmem [#allocation11], %s429
          %431 = dma.done %s427, 128
        $region68: #{tpu_custom_call.1} parent=59 // pred_fallthru
          _
        // Predicated region
        $region69: #{tpu_custom_call.1} parent=59 // pred_check
          %p432 = pneg %p180
        $region70: #{tpu_custom_call.1} parent=59 // pred_check_branch
          %434 = sbr.rel (%p432) target = $region72
        $region71: #{tpu_custom_call.1} parent=59 // pred_region
          %s435 = sand.u32 %s29, 1
          %s436 = scalar_lea.sflag [#allocation12], %s435
          %s437 = sand.u32 %s165, 1
          %s438 = smul.addr %s437, 8
          %s439 = scalar_lea.vmem [#allocation13], %s438
          %440 = dma.done %s436, 128
        $region72: #{tpu_custom_call.1} parent=59 // pred_fallthru
          _
      $region60: #{tpu_custom_call.1} parent=5 // pred_fallthru
        _
    $region6: #{tpu_custom_call.1} parent=1 // loop_footer
      %s27 = sadd.s32 1, %s23
    $region7: #{tpu_custom_call.1} parent=1 // loop_footer_branch
      %22 = sbr.rel target = $region3
    $region8: #{tpu_custom_call.1} parent=1 // loop_exit
      _
    %441 = vsyncpa [#allocation6], 1
    %s442 = scalar_lea.sflag [#allocation6], 1
    %443 = vsyncpa %s442, 1
    %444 = vsyncpa [#allocation9], 1
    %s445 = scalar_lea.sflag [#allocation9], 1
    %446 = vsyncpa %s445, 1
    %447 = vsyncpa [#allocation7], 1
    %s448 = scalar_lea.sflag [#allocation7], 1
    %449 = vsyncpa %s448, 1
    %450 = vsyncpa [#allocation12], 1
    %s451 = scalar_lea.sflag [#allocation12], 1
    %452 = vsyncpa %s451, 1

</llo_original>
